<compile_context>
chip_gen: v7x
topology: tpu7x:2x2x1
jax: 0.10.0
libtpu: 0.0.40
codegen_flags: <defaults>
</compile_context>

<pallas_src>
import functools

import jax
import jax.numpy as jnp
from jax import lax
from jax.experimental import pallas as pl
from jax.experimental.pallas import tpu as pltpu


def _round_up(x, m):
    return ((x + m - 1) // m) * m


def _pick_block_n(N, T, D2, budget_bytes=6 * 1024 * 1024):
    """Rows per grid step: multiple of 8, sized for the default scoped VMEM."""
    # Per row: double-buffered f32 input block (2 * T * D2 * 4 bytes) plus
    # roughly four live (T, D2)-sized temporaries in the body (u_pre, u_it,
    # bf16 cast, product for s).
    per_row = 2 * T * D2 * 4 + 16 * T * D2
    bn = (budget_bytes // max(per_row, 1)) // 8 * 8
    bn = max(8, min(512, bn))
    return min(bn, _round_up(N, 8))


def _attention_kernel(h_ref, w_ref, b_ref, uw_ref, s_ref, att_ref,
                      *, compute_dtype, approx_recip):
    bn, T, D2 = h_ref.shape

    H = h_ref[...]          # (bn, T, 2H)  time-major hidden block (f32)
    W = w_ref[...]          # (2H, 2H)     VMEM-resident across grid steps
    b = b_ref[...]          # (1, 2H)
    uw = uw_ref[...]        # (bn, 2H)     precomputed u_w trajectory slice

    # One batched MXU matmul for the whole block: (bn*T, 2H) @ W^T.
    # The (bn, T, 2H) -> (bn*T, 2H) reshape is a free re-tiling as long as T
    # is a multiple of 8 (sublane count); bf16 operands, f32 accumulation.
    Hf = H.reshape(bn * T, D2)
    u_pre = lax.dot_general(
        Hf.astype(compute_dtype), W.astype(compute_dtype),
        (((1,), (1,)), ((), ())),
        preferred_element_type=jnp.float32)                    # (bn*T, 2H) f32
    u_it = jnp.tanh(u_pre + b).reshape(bn, T, D2)

    # logits[n, t] = <u_it[n, t, :], u_w[n, :]>   (VPU mul + lane reduce)
    logits = jnp.sum(u_it * uw[:, None, :], axis=-1)            # (bn, T)

    # Softmax over T (== torch Softmax(dim=0) applied to each (T, 1) column).
    m = jnp.max(logits, axis=-1, keepdims=True)
    e = jnp.exp(logits - m)
    denom = jnp.sum(e, axis=-1, keepdims=True)
    a = e * pl.reciprocal(denom, approx=approx_recip)           # (bn, T)

    # Lane-dense full-block stores.
    att_ref[...] = a                                            # (bn, T)
    # s[n, :] = sum_t a[n, t] * H[n, t, :]
    s_ref[...] = jnp.sum(H * a[:, :, None], axis=1)             # (bn, 2H)


@functools.partial(jax.jit,
                   static_argnames=("compute_dtype", "block_n", "time_major"))
def attention_layer_forward(hidden_states, W_attention, bias_attention, u_w0,
                            *, compute_dtype=jnp.bfloat16, block_n=None,
                            time_major=False):
    """hidden_states: (N, 2H, T), or (N, T, 2H) if time_major=True.
    Returns (s: (N, 2H), attention: (T, N))."""
    if time_major:
        N, T, D2 = hidden_states.shape
        hs_tm = hidden_states                                   # (N, T, 2H)
    else:
        N, D2, T = hidden_states.shape
        # NOTE: if the upstream producer can emit (N, T, 2H) directly, pass
        # time_major=True and this standalone HBM relayout pass disappears.
        hs_tm = jnp.transpose(hidden_states, (0, 2, 1))         # (N, T, 2H)

    W = W_attention.astype(jnp.float32)
    b2d = bias_attention.reshape(1, D2).astype(jnp.float32)

    # u_w trajectory: u_w_i = l2_normalize(u_w_{i-1} @ W.T + b).  It never
    # touches hidden_states, so precompute it (partially unrolled scan) and
    # pass it as a plain blocked input -> no serial carry inside the kernel.
    def step(uw, _):
        uw = uw @ W.T + b2d
        nrm = jnp.sqrt(jnp.sum(uw * uw, axis=1, keepdims=True))
        uw = uw / jnp.maximum(nrm, 1e-12)        # torch F.normalize eps clamp
        return uw, uw

    _, uw_stacked = lax.scan(step, u_w0.astype(jnp.float32), None, length=N,
                             unroll=min(8, N))
    uw_traj = uw_stacked[:, 0, :]                               # (N, 2H)

    bn = block_n if block_n is not None else _pick_block_n(N, T, D2)
    bn = _round_up(max(8, min(bn, _round_up(N, 8))), 8)
    Np = _round_up(N, bn)
    if Np != N:
        pad = Np - N
        hs_tm = jnp.pad(hs_tm, ((0, pad), (0, 0), (0, 0)))
        uw_traj = jnp.pad(uw_traj, ((0, pad), (0, 0)))

    kernel = functools.partial(
        _attention_kernel,
        compute_dtype=compute_dtype,
        approx_recip=(jnp.dtype(compute_dtype) != jnp.dtype(jnp.float32)))

    s, att = pl.pallas_call(
        kernel,
        out_shape=(
            jax.ShapeDtypeStruct((Np, D2), jnp.float32),        # s
            jax.ShapeDtypeStruct((Np, T), jnp.float32),         # attention^T
        ),
        grid=(Np // bn,),
        in_specs=[
            pl.BlockSpec((bn, T, D2), lambda i: (i, 0, 0)),     # hidden block
            pl.BlockSpec((D2, D2), lambda i: (0, 0)),           # W (resident)
            pl.BlockSpec((1, D2), lambda i: (0, 0)),            # bias (resident)
            pl.BlockSpec((bn, D2), lambda i: (i, 0)),           # u_w trajectory
        ],
        out_specs=(
            pl.BlockSpec((bn, D2), lambda i: (i, 0)),
            pl.BlockSpec((bn, T), lambda i: (i, 0)),
        ),
        compiler_params=pltpu.CompilerParams(
            dimension_semantics=("parallel",),      # megacore on v7x
            vmem_limit_bytes=32 * 1024 * 1024,      # v5e default is only 16 MiB
        ),
    )(hs_tm, W, b2d, uw_traj)

    if Np != N:
        s = s[:N]
        att = att[:N]
    return s, att.T   # attention is (T, N), matching torch.cat(..., dim=1)


def _reference(hidden_states, W, b, uw0, matmul_dtype=jnp.float32):
    """Pure-JAX reference mirroring the PyTorch loop."""
    N = hidden_states.shape[0]
    b = b.reshape(1, -1)
    Wc = W.astype(matmul_dtype)
    uw = uw0
    s_rows, a_cols = [], []
    for i in range(N):
        H = hidden_states[i]
        u_pre = jnp.matmul(H.T.astype(matmul_dtype), Wc.T,
                           preferred_element_type=jnp.float32)
        u_it = jnp.tanh(u_pre + b)
        uw = uw @ W.T + b
        uw = uw / jnp.maximum(jnp.linalg.norm(uw, axis=1, keepdims=True), 1e-12)
        logits = u_it @ uw.T
        a = jax.nn.softmax(logits, axis=0)
        a_cols.append(a)
        s_rows.append((H @ a).T)
    return jnp.concatenate(s_rows, axis=0), jnp.concatenate(a_cols, axis=1)


if __name__ == "__main__":
    hidden_dim = 16
    D2 = 2 * hidden_dim      # 32
    T = 8                    # per-element sequence length (multiple of 8)
    N = 2                    # number of elements in hidden_states

    key = jax.random.PRNGKey(0)
    k_h, k_w, k_b, k_u = jax.random.split(key, 4)

    hidden_states = jax.random.normal(k_h, (N, D2, T), dtype=jnp.float32)
    W_attention = jax.random.normal(k_w, (D2, D2), dtype=jnp.float32)
    bias_attention = jax.random.normal(k_b, (D2,), dtype=jnp.float32)
    # TODO(synk): the torch module samples u_w ~ randn inside forward(); here
    # it is taken as an explicit deterministic input u_w0.
    u_w0 = jax.random.normal(k_u, (1, D2), dtype=jnp.float32)

    # --- exact path (f32 MXU, exact reciprocal): tight check ---------------
    s32, att32 = attention_layer_forward(hidden_states, W_attention,
                                         bias_attention, u_w0,
                                         compute_dtype=jnp.float32)
    jax.block_until_ready((s32, att32))
    s_ref, att_ref = _reference(hidden_states, W_attention, bias_attention, u_w0)
    assert s32.shape == (N, D2) and att32.shape == (T, N)
    assert jnp.allclose(s32, s_ref, rtol=1e-5, atol=1e-5)
    assert jnp.allclose(att32, att_ref, rtol=1e-5, atol=1e-5)

    # --- fast path (bf16 MXU operands, approx reciprocal): loose check -----
    sbf, attbf = attention_layer_forward(hidden_states, W_attention,
                                         bias_attention, u_w0)
    jax.block_until_ready((sbf, attbf))
    s_ref16, att_ref16 = _reference(hidden_states, W_attention, bias_attention,
                                    u_w0, matmul_dtype=jnp.bfloat16)
    assert jnp.allclose(sbf, s_ref16, rtol=2e-2, atol=2e-2)
    assert jnp.allclose(attbf, att_ref16, rtol=2e-2, atol=2e-2)

    # --- multi-step grid (grid=(2,)), ragged-N padding, time-major input ---
    N2 = 12
    hs2 = jax.random.normal(jax.random.PRNGKey(1), (N2, D2, T), dtype=jnp.float32)
    s2, att2 = attention_layer_forward(
        jnp.transpose(hs2, (0, 2, 1)), W_attention, bias_attention, u_w0,
        compute_dtype=jnp.float32, block_n=8, time_major=True)
    jax.block_until_ready((s2, att2))
    s2_ref, att2_ref = _reference(hs2, W_attention, bias_attention, u_w0)
    assert s2.shape == (N2, D2) and att2.shape == (T, N2)
    assert jnp.allclose(s2, s2_ref, rtol=1e-5, atol=1e-5)
    assert jnp.allclose(att2, att2_ref, rtol=1e-5, atol=1e-5)

    print("KERNEL_OK")
</pallas_src>

<mosaic_0001>
module attributes {stable_mosaic.version = 11 : i64} {
  func.func @_attention_kernel(%arg0: i32, %arg1: memref<8x8x32xf32, #tpu.memory_space<vmem>>, %arg2: memref<32x32xf32, #tpu.memory_space<vmem>>, %arg3: memref<1x32xf32, #tpu.memory_space<vmem>>, %arg4: memref<8x32xf32, #tpu.memory_space<vmem>>, %arg5: memref<8x32xf32, #tpu.memory_space<vmem>>, %arg6: memref<8x8xf32, #tpu.memory_space<vmem>>) attributes {dimension_semantics = [#tpu.dimension_semantics<parallel>], iteration_bounds = array<i64: 1>, scalar_prefetch = 0 : i64, scratch_operands = 0 : i64, tpu.core_type = #tpu.core_type<tc>, window_params = [{transform_indices = @transform_0, window_bounds = array<i64: 8, 8, 32>}, {pipeline_mode = #tpu.pipeline_mode<synchronous>, transform_indices = @transform_1, window_bounds = array<i64: 32, 32>}, {pipeline_mode = #tpu.pipeline_mode<synchronous>, transform_indices = @transform_2, window_bounds = array<i64: 1, 32>}, {transform_indices = @transform_3, window_bounds = array<i64: 8, 32>}, {transform_indices = @transform_4, window_bounds = array<i64: 8, 32>}, {transform_indices = @transform_5, window_bounds = array<i64: 8, 8>}]} {
    %c0 = arith.constant 0 : index
    %c0_0 = arith.constant 0 : index
    %c0_1 = arith.constant 0 : index
    %0 = vector.load %arg1[%c0, %c0_0, %c0_1] : memref<8x8x32xf32, #tpu.memory_space<vmem>>, vector<8x8x32xf32>
    %c0_2 = arith.constant 0 : index
    %c0_3 = arith.constant 0 : index
    %1 = vector.load %arg2[%c0_2, %c0_3] : memref<32x32xf32, #tpu.memory_space<vmem>>, vector<32x32xf32>
    %c0_4 = arith.constant 0 : index
    %c0_5 = arith.constant 0 : index
    %2 = vector.load %arg3[%c0_4, %c0_5] : memref<1x32xf32, #tpu.memory_space<vmem>>, vector<1x32xf32>
    %c0_6 = arith.constant 0 : index
    %c0_7 = arith.constant 0 : index
    %3 = vector.load %arg4[%c0_6, %c0_7] : memref<8x32xf32, #tpu.memory_space<vmem>>, vector<8x32xf32>
    %4 = vector.shape_cast %0 : vector<8x8x32xf32> to vector<64x32xf32>
    %cst = arith.constant dense<0.000000e+00> : vector<64x32xf32>
    %5 = tpu.matmul %4, %1, %cst {dimension_numbers = #tpu.dot_dimension_numbers<[1], [1], [0], [0], [0, 0, 1, 0], [], []>} : vector<64x32xf32>, vector<32x32xf32>, vector<64x32xf32> -> vector<64x32xf32>
    %6 = vector.broadcast %2 : vector<1x32xf32> to vector<64x32xf32>
    %7 = arith.addf %5, %6 : vector<64x32xf32>
    %8 = math.tanh %7 : vector<64x32xf32>
    %9 = vector.shape_cast %8 : vector<64x32xf32> to vector<8x8x32xf32>
    %10 = vector.shape_cast %3 : vector<8x32xf32> to vector<8x1x32xf32>
    %11 = vector.broadcast %10 : vector<8x1x32xf32> to vector<8x8x32xf32>
    %12 = arith.mulf %9, %11 : vector<8x8x32xf32>
    %cst_8 = arith.constant dense<0.000000e+00> : vector<8x8xf32>
    %13 = vector.multi_reduction <add>, %12, %cst_8 [2] : vector<8x8x32xf32> to vector<8x8xf32>
    %cst_9 = arith.constant dense<0xFF800000> : vector<8xf32>
    %14 = vector.multi_reduction <maximumf>, %13, %cst_9 [1] : vector<8x8xf32> to vector<8xf32>
    %15 = vector.shape_cast %14 : vector<8xf32> to vector<8x1xf32>
    %16 = vector.broadcast %15 : vector<8x1xf32> to vector<8x8xf32>
    %17 = arith.subf %13, %16 : vector<8x8xf32>
    %18 = math.exp %17 : vector<8x8xf32>
    %cst_10 = arith.constant dense<0.000000e+00> : vector<8xf32>
    %19 = vector.multi_reduction <add>, %18, %cst_10 [1] : vector<8x8xf32> to vector<8xf32>
    %20 = vector.shape_cast %19 : vector<8xf32> to vector<8x1xf32>
    %21 = tpu.reciprocal %20 : vector<8x1xf32> -> vector<8x1xf32>
    %22 = vector.broadcast %21 : vector<8x1xf32> to vector<8x8xf32>
    %23 = arith.mulf %18, %22 : vector<8x8xf32>
    %c0_11 = arith.constant 0 : index
    %c0_12 = arith.constant 0 : index
    %24 = vector.load %arg6[%c0_11, %c0_12] : memref<8x8xf32, #tpu.memory_space<vmem>>, vector<8x8xf32>
    tpu.vector_store %arg6[%c0_11, %c0_12], %23 {strides = array<i32>} : memref<8x8xf32, #tpu.memory_space<vmem>>, vector<8x8xf32>,
    %25 = vector.shape_cast %23 : vector<8x8xf32> to vector<8x8x1xf32>
    %26 = vector.broadcast %25 : vector<8x8x1xf32> to vector<8x8x32xf32>
    %27 = arith.mulf %0, %26 : vector<8x8x32xf32>
    %cst_13 = arith.constant dense<0.000000e+00> : vector<8x32xf32>
    %28 = vector.multi_reduction <add>, %27, %cst_13 [1] : vector<8x8x32xf32> to vector<8x32xf32>
    %c0_14 = arith.constant 0 : index
    %c0_15 = arith.constant 0 : index
    %29 = vector.load %arg5[%c0_14, %c0_15] : memref<8x32xf32, #tpu.memory_space<vmem>>, vector<8x32xf32>
    tpu.vector_store %arg5[%c0_14, %c0_15], %28 {strides = array<i32>} : memref<8x32xf32, #tpu.memory_space<vmem>>, vector<8x32xf32>,
    return
  }
  func.func @transform_0(%arg0: i32) -> (i32, i32, i32) {
    %c0_i32 = arith.constant 0 : i32
    %c0_i32_0 = arith.constant 0 : i32
    %c0_i32_1 = arith.constant 0 : i32
    return %arg0, %c0_i32, %c0_i32_0 : i32, i32, i32
  }
  func.func @transform_1(%arg0: i32) -> (i32, i32) {
    %c0_i32 = arith.constant 0 : i32
    %c0_i32_0 = arith.constant 0 : i32
    %c0_i32_1 = arith.constant 0 : i32
    return %c0_i32, %c0_i32_0 : i32, i32
  }
  func.func @transform_2(%arg0: i32) -> (i32, i32) {
    %c0_i32 = arith.constant 0 : i32
    %c0_i32_0 = arith.constant 0 : i32
    %c0_i32_1 = arith.constant 0 : i32
    return %c0_i32, %c0_i32_0 : i32, i32
  }
  func.func @transform_3(%arg0: i32) -> (i32, i32) {
    %c0_i32 = arith.constant 0 : i32
    %c0_i32_0 = arith.constant 0 : i32
    return %arg0, %c0_i32 : i32, i32
  }
  func.func @transform_4(%arg0: i32) -> (i32, i32) {
    %c0_i32 = arith.constant 0 : i32
    %c0_i32_0 = arith.constant 0 : i32
    return %arg0, %c0_i32 : i32, i32
  }
  func.func @transform_5(%arg0: i32) -> (i32, i32) {
    %c0_i32 = arith.constant 0 : i32
    %c0_i32_0 = arith.constant 0 : i32
    return %arg0, %c0_i32 : i32, i32
  }
}

</mosaic_0001>

<llo_original>
// kernel: attention_layer_forward.1
$region0: #{attention_layer_forward.1}
  #allocation0 [shape = 'u32[]', space=smem, size = 0x4, offset = 0x4, fixed_abs, tag = 'smem constant byte address 0x4 - core index']
  #allocation1 [shape = 'u32[144,128]{1,0:T(1,128)}', space=vmem, size = 0x12000, scoped, tag = 'internal scratch']
  %s0 = inlined_call_operand.vmem [shape: f32[8,8,32], index: 0, kind: input, shape index: {}]
  %s1 = inlined_call_operand.vmem [shape: f32[32,32], index: 1, kind: input, shape index: {}]
  %s2 = inlined_call_operand.vmem [shape: f32[1,32], index: 2, kind: input, shape index: {}]
  %s3 = inlined_call_operand.vmem [shape: f32[8,32], index: 3, kind: input, shape index: {}]
  %s4 = inlined_call_operand.vmem [shape: f32[8,32], index: 4, kind: output, shape index: {0}]
  %s5 = inlined_call_operand.vmem [shape: f32[8,8], index: 5, kind: output, shape index: {1}]
  %6 = xla_tuple %s4, %s5
  %s7 = sld [smem:[#allocation0]]
  $region34: #{attention_layer_forward.1} parent=0
    _
  %s9 = ssub.s32 1, %s7
  %s10 = scalar_select 0, %s9, %s7
  // Predicated region
  $region2: #{attention_layer_forward.1} parent=0 // pred_check
    _
  $region3: #{attention_layer_forward.1} parent=0 // pred_check_branch
    %12 = sbr.rel (0) target = $region5
  $region4: #{attention_layer_forward.1} parent=0 // pred_region
    _
  $region5: #{attention_layer_forward.1} parent=0 // pred_fallthru
    _
  // Predicated region
  $region6: #{attention_layer_forward.1} parent=0 // pred_check
    _
  $region7: #{attention_layer_forward.1} parent=0 // pred_check_branch
    %14 = sbr.rel (0) target = $region9
  $region8: #{attention_layer_forward.1} parent=0 // pred_region
    _
  $region9: #{attention_layer_forward.1} parent=0 // pred_fallthru
    _
  // Predicated region
  $region10: #{attention_layer_forward.1} parent=0 // pred_check
    _
  $region11: #{attention_layer_forward.1} parent=0 // pred_check_branch
    %16 = sbr.rel (0) target = $region13
  $region12: #{attention_layer_forward.1} parent=0 // pred_region
    _
  $region13: #{attention_layer_forward.1} parent=0 // pred_fallthru
    _
  // Predicated region
  $region14: #{attention_layer_forward.1} parent=0 // pred_check
    _
  $region15: #{attention_layer_forward.1} parent=0 // pred_check_branch
    %18 = sbr.rel (0) target = $region17
  $region16: #{attention_layer_forward.1} parent=0 // pred_region
    _
  $region17: #{attention_layer_forward.1} parent=0 // pred_fallthru
    _
  %v19 = vld [vmem:[%s0] sm:$0xff]
  %v20 = vld [vmem:[%s0 + $0x8] sm:$0xff]
  %v21 = vld [vmem:[%s0 + $0x10] sm:$0xff]
  %v22 = vld [vmem:[%s0 + $0x18] sm:$0xff]
  %v23 = vld [vmem:[%s0 + $0x20] sm:$0xff]
  %v24 = vld [vmem:[%s0 + $0x28] sm:$0xff]
  %v25 = vld [vmem:[%s0 + $0x30] sm:$0xff]
  %v26 = vld [vmem:[%s0 + $0x38] sm:$0xff]
  %v27 = vld [vmem:[%s1] sm:$0xff]
  %v28 = vld [vmem:[%s1 + $0x8] sm:$0xff]
  %v29 = vld [vmem:[%s1 + $0x10] sm:$0xff]
  %v30 = vld [vmem:[%s1 + $0x18] sm:$0xff]
  %v31 = vld [vmem:[%s2] sm:$0x1]
  %v32 = vld [vmem:[%s3] sm:$0xff]
  %v34 = vlaneseq
  %v35 = vshrl.u32 %v34, 7
  %v36 = vsub.s32 0, %v35
  %v37 = vrot.slane %v31, %v36
  %vm39 = vcmask 261120
  %v41 = vsel %vm39, %v19, 0
  %v44 = vsel %vm39, %v20, 0
  %v47 = vsel %vm39, %v21, 0
  %v50 = vsel %vm39, %v22, 0
  %v53 = vsel %vm39, %v23, 0
  %v56 = vsel %vm39, %v24, 0
  %v59 = vsel %vm39, %v25, 0
  %v62 = vsel %vm39, %v26, 0
  %v65 = vsel %vm39, %v27, 0
  %v68 = vsel %vm39, %v28, 0
  %v71 = vsel %vm39, %v29, 0
  %v74 = vsel %vm39, %v30, 0
  %76 = vmatprep.subr.mxu0 0.0
  %77 = vmatpush1.xpose.msra.mxu0 %v65
  %78 = vmatprep.subr.mxu0 0.0
  %79 = vmatpush1.xpose.msra.mxu0 %v68
  %80 = vmatprep.subr.mxu0 0.0
  %81 = vmatpush1.xpose.msra.mxu0 %v71
  %82 = vmatprep.subr.mxu0 0.0
  %83 = vmatpush1.xpose.msra.mxu0 %v74
  %84 = vmatprep.subr.mxu0 0.0
  %85 = vmatpush1.xpose.msra.mxu0 0.0
  %86 = vmatprep.subr.mxu0 0.0
  %87 = vmatpush1.xpose.msra.mxu0 0.0
  %88 = vmatprep.subr.mxu0 0.0
  %89 = vmatpush1.xpose.msra.mxu0 0.0
  %90 = vmatprep.subr.mxu0 0.0
  %91 = vmatpush1.xpose.msra.mxu0 0.0
  %92 = vmatprep.subr.mxu0 0.0
  %93 = vmatpush1.xpose.msra.mxu0 0.0
  %94 = vmatprep.subr.mxu0 0.0
  %95 = vmatpush1.xpose.msra.mxu0 0.0
  %96 = vmatprep.subr.mxu0 0.0
  %97 = vmatpush1.xpose.msra.mxu0 0.0
  %98 = vmatprep.subr.mxu0 0.0
  %99 = vmatpush1.xpose.msra.mxu0 0.0
  %100 = vmatprep.subr.mxu0 0.0
  %101 = vmatpush1.xpose.msra.mxu0 0.0
  %102 = vmatprep.subr.mxu0 0.0
  %103 = vmatpush1.xpose.msra.mxu0 0.0
  %104 = vmatprep.subr.mxu0 0.0
  %105 = vmatpush1.xpose.msra.mxu0 0.0
  %106 = vmatprep.subr.mxu0 0.0
  %107 = vmatpush1.xpose.msra.mxu0 0.0
  %108 = vmatprep.subr.mxu0 0.0
  %109 = vmatpush1.xpose.msra.mxu0 0.0
  %110 = vmatprep.subr.mxu0 0.0
  %111 = vmatpush1.xpose.msra.mxu0 0.0
  %112 = vmatprep.subr.mxu0 0.0
  %113 = vmatpush1.xpose.msra.mxu0 0.0
  %114 = vmatprep.subr.mxu0 0.0
  %115 = vmatpush1.xpose.msra.mxu0 0.0
  %116 = vmatprep.subr.mxu0 0.0
  %117 = vmatpush1.xpose.msra.mxu0 0.0
  %118 = vmatprep.subr.mxu0 0.0
  %119 = vmatpush1.xpose.msra.mxu0 0.0
  %120 = vmatprep.subr.mxu0 0.0
  %121 = vmatpush1.xpose.msra.mxu0 0.0
  %122 = vmatprep.subr.mxu0 0.0
  %123 = vmatpush1.xpose.msra.mxu0 0.0
  %124 = vmatprep.subr.mxu0 0.0
  %125 = vmatpush1.xpose.msra.mxu0 0.0
  %126 = vmatprep.subr.mxu0 0.0
  %127 = vmatpush1.xpose.msra.mxu0 0.0
  %128 = vmatprep.subr.mxu0 0.0
  %129 = vmatpush1.xpose.msra.mxu0 0.0
  %130 = vmatprep.subr.mxu0 0.0
  %131 = vmatpush1.xpose.msra.mxu0 0.0
  %132 = vmatprep.subr.mxu0 0.0
  %133 = vmatpush1.xpose.msra.mxu0 0.0
  %134 = vmatprep.subr.mxu0 0.0
  %135 = vmatpush1.xpose.msra.mxu0 0.0
  %136 = vmatprep.subr.mxu0 0.0
  %137 = vmatpush1.xpose.msra.mxu0 0.0
  %138 = vmatprep.subr.mxu0 0.0
  %139 = vmatpush1.xpose.msra.mxu0 0.0
  %140 = vmatprep.mubr.f32.mxu0 0.0
  %141 = vmatmul.mubr.f32.gmra.mrb[0].mxu0 %v41
  %v142 = vpop.f32.mrb[0].mxu0
  %v143 = vadd.f32 %v37, %v142
  %v144 = vpop.f32.mrb[0].mxu0
  %145 = vmatprep.mubr.f32.mxu0 0.0
  %146 = vmatmul.mubr.f32.gmra.mrb[0].mxu0 %v44
  %v147 = vpop.f32.mrb[0].mxu0
  %v148 = vadd.f32 %v37, %v147
  %v149 = vpop.f32.mrb[0].mxu0
  %150 = vmatprep.mubr.f32.mxu0 0.0
  %151 = vmatmul.mubr.f32.gmra.mrb[0].mxu0 %v47
  %v152 = vpop.f32.mrb[0].mxu0
  %v153 = vadd.f32 %v37, %v152
  %v154 = vpop.f32.mrb[0].mxu0
  %155 = vmatprep.mubr.f32.mxu0 0.0
  %156 = vmatmul.mubr.f32.gmra.mrb[0].mxu0 %v50
  %v157 = vpop.f32.mrb[0].mxu0
  %v158 = vadd.f32 %v37, %v157
  %v159 = vpop.f32.mrb[0].mxu0
  %160 = vmatprep.mubr.f32.mxu0 0.0
  %161 = vmatmul.mubr.f32.gmra.mrb[0].mxu0 %v53
  %v162 = vpop.f32.mrb[0].mxu0
  %v163 = vadd.f32 %v37, %v162
  %v164 = vpop.f32.mrb[0].mxu0
  %165 = vmatprep.mubr.f32.mxu0 0.0
  %166 = vmatmul.mubr.f32.gmra.mrb[0].mxu0 %v56
  %v167 = vpop.f32.mrb[0].mxu0
  %v168 = vadd.f32 %v37, %v167
  %v169 = vpop.f32.mrb[0].mxu0
  %170 = vmatprep.mubr.f32.mxu0 0.0
  %171 = vmatmul.mubr.f32.gmra.mrb[0].mxu0 %v59
  %v172 = vpop.f32.mrb[0].mxu0
  %v173 = vadd.f32 %v37, %v172
  %v174 = vpop.f32.mrb[0].mxu0
  %175 = vmatprep.mubr.f32.mxu0 0.0
  %176 = vmatmul.mubr.f32.gmra.mrb[0].mxu0 %v62
  %v177 = vpop.f32.mrb[0].mxu0
  %v178 = vadd.f32 %v37, %v177
  %v179 = vpop.f32.mrb[0].mxu0
  %180 = vdwg.mxu0
  %v181 = vtanh.pop %v143
  %v182 = vtanh.pop %v148
  %v183 = vtanh.pop %v153
  %v184 = vtanh.pop %v158
  %v185 = vtanh.pop %v163
  %v186 = vtanh.pop %v168
  %v187 = vtanh.pop %v173
  %v188 = vtanh.pop %v178
  %v190 = vcombine.high %v32, %v32
  %v192 = vunpack.c.l.s4 1966171168
  %v193 = vunpack.c.0.s8 %v192
  %v194 = vlaneseq
  %v195 = vshrl.u32 %v194, 7
  %v196 = vsub.s32 %v193, %v195
  %v197 = vrot.slane %v32, %v196
  %v199 = vunpack.c.l.s4 1966171168
  %v200 = vunpack.c.0.s8 %v199
  %v201 = vlaneseq
  %v202 = vshrl.u32 %v201, 7
  %v203 = vsub.s32 %v200, %v202
  %v204 = vrot.slane %v190, %v203
  %v205 = vcombine.high %v197, %v197
  %v206 = vcombine.high %v204, %v204
  %v208 = vunpack.c.l.s4 1966171168
  %v209 = vunpack.c.0.s8 %v208
  %v210 = vlaneseq
  %v211 = vshrl.u32 %v210, 7
  %v212 = vsub.s32 %v209, %v211
  %v213 = vrot.slane %v197, %v212
  %v215 = vunpack.c.l.s4 1966171168
  %v216 = vunpack.c.0.s8 %v215
  %v217 = vlaneseq
  %v218 = vshrl.u32 %v217, 7
  %v219 = vsub.s32 %v216, %v218
  %v220 = vrot.slane %v204, %v219
  %v222 = vunpack.c.l.s4 1966171168
  %v223 = vunpack.c.0.s8 %v222
  %v224 = vlaneseq
  %v225 = vshrl.u32 %v224, 7
  %v226 = vsub.s32 %v223, %v225
  %v227 = vrot.slane %v205, %v226
  %v229 = vunpack.c.l.s4 1966171168
  %v230 = vunpack.c.0.s8 %v229
  %v231 = vlaneseq
  %v232 = vshrl.u32 %v231, 7
  %v233 = vsub.s32 %v230, %v232
  %v234 = vrot.slane %v206, %v233
  %v235 = vcombine.high %v213, %v213
  %v236 = vcombine.high %v220, %v220
  %v237 = vcombine.high %v227, %v227
  %v238 = vcombine.high %v234, %v234
  %v239 = vlaneseq
  %v240 = vshrl.u32 %v239, 7
  %v241 = vsub.s32 0, %v240
  %v242 = vrot.slane %v213, %v241
  %v243 = vlaneseq
  %v244 = vshrl.u32 %v243, 7
  %v245 = vsub.s32 0, %v244
  %v246 = vrot.slane %v227, %v245
  %v247 = vlaneseq
  %v248 = vshrl.u32 %v247, 7
  %v249 = vsub.s32 0, %v248
  %v250 = vrot.slane %v235, %v249
  %v251 = vlaneseq
  %v252 = vshrl.u32 %v251, 7
  %v253 = vsub.s32 0, %v252
  %v254 = vrot.slane %v237, %v253
  %v255 = vlaneseq
  %v256 = vshrl.u32 %v255, 7
  %v257 = vsub.s32 0, %v256
  %v258 = vrot.slane %v220, %v257
  %v259 = vlaneseq
  %v260 = vshrl.u32 %v259, 7
  %v261 = vsub.s32 0, %v260
  %v262 = vrot.slane %v234, %v261
  %v263 = vlaneseq
  %v264 = vshrl.u32 %v263, 7
  %v265 = vsub.s32 0, %v264
  %v266 = vrot.slane %v236, %v265
  %v267 = vlaneseq
  %v268 = vshrl.u32 %v267, 7
  %v269 = vsub.s32 0, %v268
  %v270 = vrot.slane %v238, %v269
  %v279 = vmul.f32 %v181, %v242
  %v280 = vmul.f32 %v182, %v246
  %v281 = vmul.f32 %v183, %v250
  %v282 = vmul.f32 %v184, %v254
  %v283 = vmul.f32 %v185, %v258
  %v284 = vmul.f32 %v186, %v262
  %v285 = vmul.f32 %v187, %v266
  %v286 = vmul.f32 %v188, %v270
  %v287 = vsel %vm39, %v279, 0.0
  %288 = vadd.xlane.f32.xlu0 %v287
  %v289 = vpop.xlane.xlu0 %288
  %v290 = vsel %vm39, %v280, 0.0
  %291 = vadd.xlane.f32.xlu0 %v290
  %v292 = vpop.xlane.xlu0 %291
  %v293 = vsel %vm39, %v281, 0.0
  %294 = vadd.xlane.f32.xlu0 %v293
  %v295 = vpop.xlane.xlu0 %294
  %v296 = vsel %vm39, %v282, 0.0
  %297 = vadd.xlane.f32.xlu0 %v296
  %v298 = vpop.xlane.xlu0 %297
  %v299 = vsel %vm39, %v283, 0.0
  %300 = vadd.xlane.f32.xlu0 %v299
  %v301 = vpop.xlane.xlu0 %300
  %v302 = vsel %vm39, %v284, 0.0
  %303 = vadd.xlane.f32.xlu0 %v302
  %v304 = vpop.xlane.xlu0 %303
  %v305 = vsel %vm39, %v285, 0.0
  %306 = vadd.xlane.f32.xlu0 %v305
  %v307 = vpop.xlane.xlu0 %306
  %v308 = vsel %vm39, %v286, 0.0
  %309 = vadd.xlane.f32.xlu0 %v308
  %v310 = vpop.xlane.xlu0 %309
  %v319 = vlaneseq
  %v320 = vand.u32 %v319, 127
  %v321 = vlaneseq
  %v322 = vshrl.u32 %v321, 7
  %v323 = vsub.s32 %v320, %v322
  %v324 = vrot.slane %v289, %v323
  %v325 = vlaneseq
  %v326 = vshrl.u32 %v325, 7
  %v327 = vsub.s32 %v320, %v326
  %v328 = vrot.slane %v292, %v327
  %v329 = vlaneseq
  %v330 = vshrl.u32 %v329, 7
  %v331 = vsub.s32 %v320, %v330
  %v332 = vrot.slane %v295, %v331
  %v333 = vlaneseq
  %v334 = vshrl.u32 %v333, 7
  %v335 = vsub.s32 %v320, %v334
  %v336 = vrot.slane %v298, %v335
  %v337 = vlaneseq
  %v338 = vshrl.u32 %v337, 7
  %v339 = vsub.s32 %v320, %v338
  %v340 = vrot.slane %v301, %v339
  %v341 = vlaneseq
  %v342 = vshrl.u32 %v341, 7
  %v343 = vsub.s32 %v320, %v342
  %v344 = vrot.slane %v304, %v343
  %v345 = vlaneseq
  %v346 = vshrl.u32 %v345, 7
  %v347 = vsub.s32 %v320, %v346
  %v348 = vrot.slane %v307, %v347
  %v349 = vlaneseq
  %v350 = vshrl.u32 %v349, 7
  %v351 = vsub.s32 %v320, %v350
  %v352 = vrot.slane %v310, %v351
  %vm353 = vcmask 1041409
  %v354 = vsel %vm353, %v328, %v324
  %vm355 = vcmask 1042434
  %v356 = vsel %vm355, %v332, %v354
  %vm357 = vcmask 1043459
  %v358 = vsel %vm357, %v336, %v356
  %vm359 = vcmask 1044484
  %v360 = vsel %vm359, %v340, %v358
  %vm361 = vcmask 1045509
  %v362 = vsel %vm361, %v344, %v360
  %vm363 = vcmask 1046534
  %v364 = vsel %vm363, %v348, %v362
  %vm365 = vcmask 1047559
  %v366 = vsel %vm365, %v352, %v364
  %vm368 = vcmask 64512
  %v369 = vsel %vm368, %v366, -inf
  %370 = vmax.xlane.f32.xlu0 %v369
  %v371 = vpop.xlane.xlu0 %370
  %v373 = vlaneseq
  %v374 = vshrl.u32 %v373, 7
  %v375 = vsub.s32 0, %v374
  %v376 = vrot.slane %v371, %v375
  %v377 = vlaneseq
  %v378 = vshrl.u32 %v377, 7
  %v379 = vsub.s32 1, %v378
  %v380 = vrot.slane %v371, %v379
  %v381 = vlaneseq
  %v382 = vshrl.u32 %v381, 7
  %v383 = vsub.s32 2, %v382
  %v384 = vrot.slane %v371, %v383
  %v385 = vlaneseq
  %v386 = vshrl.u32 %v385, 7
  %v387 = vsub.s32 3, %v386
  %v388 = vrot.slane %v371, %v387
  %v389 = vlaneseq
  %v390 = vshrl.u32 %v389, 7
  %v391 = vsub.s32 4, %v390
  %v392 = vrot.slane %v371, %v391
  %v393 = vlaneseq
  %v394 = vshrl.u32 %v393, 7
  %v395 = vsub.s32 5, %v394
  %v396 = vrot.slane %v371, %v395
  %v397 = vlaneseq
  %v398 = vshrl.u32 %v397, 7
  %v399 = vsub.s32 6, %v398
  %v400 = vrot.slane %v371, %v399
  %v401 = vlaneseq
  %v402 = vshrl.u32 %v401, 7
  %v403 = vsub.s32 7, %v402
  %v404 = vrot.slane %v371, %v403
  %v413 = vsub.f32 %v289, %v376
  %v414 = vsub.f32 %v292, %v380
  %v415 = vsub.f32 %v295, %v384
  %v416 = vsub.f32 %v298, %v388
  %v417 = vsub.f32 %v301, %v392
  %v418 = vsub.f32 %v304, %v396
  %v419 = vsub.f32 %v307, %v400
  %v420 = vsub.f32 %v310, %v404
  %v421 = vmul.f32 %v413, 1.442695
  %v422 = vpow.pop %v421
  %v423 = vmul.f32 %v414, 1.442695
  %v424 = vpow.pop %v423
  %v425 = vmul.f32 %v415, 1.442695
  %v426 = vpow.pop %v425
  %v427 = vmul.f32 %v416, 1.442695
  %v428 = vpow.pop %v427
  %v429 = vmul.f32 %v417, 1.442695
  %v430 = vpow.pop %v429
  %v431 = vmul.f32 %v418, 1.442695
  %v432 = vpow.pop %v431
  %v433 = vmul.f32 %v419, 1.442695
  %v434 = vpow.pop %v433
  %v435 = vmul.f32 %v420, 1.442695
  %v436 = vpow.pop %v435
  %445 = vset.pattern.permute.xlu0 0
  %446 = vperm.xlu0 %445, %v422
  %v447 = vpop.permute.xlu0 %446
  %448 = vset.pattern.permute.xlu0 0
  %449 = vperm.xlu0 %448, %v424
  %v450 = vpop.permute.xlu0 %449
  %451 = vset.pattern.permute.xlu0 0
  %452 = vperm.xlu0 %451, %v426
  %v453 = vpop.permute.xlu0 %452
  %454 = vset.pattern.permute.xlu0 0
  %455 = vperm.xlu0 %454, %v428
  %v456 = vpop.permute.xlu0 %455
  %457 = vset.pattern.permute.xlu0 0
  %458 = vperm.xlu0 %457, %v430
  %v459 = vpop.permute.xlu0 %458
  %460 = vset.pattern.permute.xlu0 0
  %461 = vperm.xlu0 %460, %v432
  %v462 = vpop.permute.xlu0 %461
  %463 = vset.pattern.permute.xlu0 0
  %464 = vperm.xlu0 %463, %v434
  %v465 = vpop.permute.xlu0 %464
  %466 = vset.pattern.permute.xlu0 0
  %467 = vperm.xlu0 %466, %v436
  %v468 = vpop.permute.xlu0 %467
  %v469 = vlaneseq
  %v470 = vshrl.u32 %v469, 7
  %v471 = vsub.s32 %v320, %v470
  %v472 = vrot.slane %v447, %v471
  %v473 = vlaneseq
  %v474 = vshrl.u32 %v473, 7
  %v475 = vsub.s32 %v320, %v474
  %v476 = vrot.slane %v450, %v475
  %v477 = vlaneseq
  %v478 = vshrl.u32 %v477, 7
  %v479 = vsub.s32 %v320, %v478
  %v480 = vrot.slane %v453, %v479
  %v481 = vlaneseq
  %v482 = vshrl.u32 %v481, 7
  %v483 = vsub.s32 %v320, %v482
  %v484 = vrot.slane %v456, %v483
  %v485 = vlaneseq
  %v486 = vshrl.u32 %v485, 7
  %v487 = vsub.s32 %v320, %v486
  %v488 = vrot.slane %v459, %v487
  %v489 = vlaneseq
  %v490 = vshrl.u32 %v489, 7
  %v491 = vsub.s32 %v320, %v490
  %v492 = vrot.slane %v462, %v491
  %v493 = vlaneseq
  %v494 = vshrl.u32 %v493, 7
  %v495 = vsub.s32 %v320, %v494
  %v496 = vrot.slane %v465, %v495
  %v497 = vlaneseq
  %v498 = vshrl.u32 %v497, 7
  %v499 = vsub.s32 %v320, %v498
  %v500 = vrot.slane %v468, %v499
  %v501 = vsel %vm353, %v476, %v472
  %v502 = vsel %vm355, %v480, %v501
  %v503 = vsel %vm357, %v484, %v502
  %v504 = vsel %vm359, %v488, %v503
  %v505 = vsel %vm361, %v492, %v504
  %v506 = vsel %vm363, %v496, %v505
  %v507 = vsel %vm365, %v500, %v506
  %v509 = vsel %vm368, %v507, 0.0
  %510 = vadd.xlane.f32.xlu0 %v509
  %v511 = vpop.xlane.xlu0 %510
  %v512 = vrcp.pop %v511
  %v514 = vlaneseq
  %v515 = vshrl.u32 %v514, 7
  %v516 = vsub.s32 0, %v515
  %v517 = vrot.slane %v512, %v516
  %v518 = vlaneseq
  %v519 = vshrl.u32 %v518, 7
  %v520 = vsub.s32 1, %v519
  %v521 = vrot.slane %v512, %v520
  %v522 = vlaneseq
  %v523 = vshrl.u32 %v522, 7
  %v524 = vsub.s32 2, %v523
  %v525 = vrot.slane %v512, %v524
  %v526 = vlaneseq
  %v527 = vshrl.u32 %v526, 7
  %v528 = vsub.s32 3, %v527
  %v529 = vrot.slane %v512, %v528
  %v530 = vlaneseq
  %v531 = vshrl.u32 %v530, 7
  %v532 = vsub.s32 4, %v531
  %v533 = vrot.slane %v512, %v532
  %v534 = vlaneseq
  %v535 = vshrl.u32 %v534, 7
  %v536 = vsub.s32 5, %v535
  %v537 = vrot.slane %v512, %v536
  %v538 = vlaneseq
  %v539 = vshrl.u32 %v538, 7
  %v540 = vsub.s32 6, %v539
  %v541 = vrot.slane %v512, %v540
  %v542 = vlaneseq
  %v543 = vshrl.u32 %v542, 7
  %v544 = vsub.s32 7, %v543
  %v545 = vrot.slane %v512, %v544
  %v554 = vmul.f32 %v422, %v517
  %v555 = vmul.f32 %v424, %v521
  %v556 = vmul.f32 %v426, %v525
  %v557 = vmul.f32 %v428, %v529
  %v558 = vmul.f32 %v430, %v533
  %v559 = vmul.f32 %v432, %v537
  %v560 = vmul.f32 %v434, %v541
  %v561 = vmul.f32 %v436, %v545
  %570 = vset.pattern.permute.xlu0 0
  %571 = vperm.xlu0 %570, %v554
  %v572 = vpop.permute.xlu0 %571
  %573 = vset.pattern.permute.xlu0 0
  %574 = vperm.xlu0 %573, %v555
  %v575 = vpop.permute.xlu0 %574
  %576 = vset.pattern.permute.xlu0 0
  %577 = vperm.xlu0 %576, %v556
  %v578 = vpop.permute.xlu0 %577
  %579 = vset.pattern.permute.xlu0 0
  %580 = vperm.xlu0 %579, %v557
  %v581 = vpop.permute.xlu0 %580
  %582 = vset.pattern.permute.xlu0 0
  %583 = vperm.xlu0 %582, %v558
  %v584 = vpop.permute.xlu0 %583
  %585 = vset.pattern.permute.xlu0 0
  %586 = vperm.xlu0 %585, %v559
  %v587 = vpop.permute.xlu0 %586
  %588 = vset.pattern.permute.xlu0 0
  %589 = vperm.xlu0 %588, %v560
  %v590 = vpop.permute.xlu0 %589
  %591 = vset.pattern.permute.xlu0 0
  %592 = vperm.xlu0 %591, %v561
  %v593 = vpop.permute.xlu0 %592
  %v594 = vlaneseq
  %v595 = vshrl.u32 %v594, 7
  %v596 = vsub.s32 %v320, %v595
  %v597 = vrot.slane %v572, %v596
  %v598 = vlaneseq
  %v599 = vshrl.u32 %v598, 7
  %v600 = vsub.s32 %v320, %v599
  %v601 = vrot.slane %v575, %v600
  %v602 = vlaneseq
  %v603 = vshrl.u32 %v602, 7
  %v604 = vsub.s32 %v320, %v603
  %v605 = vrot.slane %v578, %v604
  %v606 = vlaneseq
  %v607 = vshrl.u32 %v606, 7
  %v608 = vsub.s32 %v320, %v607
  %v609 = vrot.slane %v581, %v608
  %v610 = vlaneseq
  %v611 = vshrl.u32 %v610, 7
  %v612 = vsub.s32 %v320, %v611
  %v613 = vrot.slane %v584, %v612
  %v614 = vlaneseq
  %v615 = vshrl.u32 %v614, 7
  %v616 = vsub.s32 %v320, %v615
  %v617 = vrot.slane %v587, %v616
  %v618 = vlaneseq
  %v619 = vshrl.u32 %v618, 7
  %v620 = vsub.s32 %v320, %v619
  %v621 = vrot.slane %v590, %v620
  %v622 = vlaneseq
  %v623 = vshrl.u32 %v622, 7
  %v624 = vsub.s32 %v320, %v623
  %v625 = vrot.slane %v593, %v624
  %v626 = vsel %vm353, %v601, %v597
  %v627 = vsel %vm355, %v605, %v626
  %v628 = vsel %vm357, %v609, %v627
  %v629 = vsel %vm359, %v613, %v628
  %v630 = vsel %vm361, %v617, %v629
  %v631 = vsel %vm363, %v621, %v630
  %v632 = vsel %vm365, %v625, %v631
  %634 = vst.msk [vmem:[%s5] sm:$0xff] %vm368, %v632
  %v643 = vmul.f32 %v19, %v572
  %v644 = vmul.f32 %v20, %v575
  %v645 = vmul.f32 %v21, %v578
  %v646 = vmul.f32 %v22, %v581
  %v647 = vmul.f32 %v23, %v584
  %v648 = vmul.f32 %v24, %v587
  %v649 = vmul.f32 %v25, %v590
  %v650 = vmul.f32 %v26, %v593
  %v651 = vsel %vm39, %v643, 0.0
  %v652 = vrot.slane %v651, 4
  %v653 = vadd.f32 %v651, %v652
  %v654 = vrot.slane %v653, 2
  %v655 = vadd.f32 %v653, %v654
  %v656 = vrot.slane %v655, 1
  %v657 = vadd.f32 %v655, %v656
  %v658 = vsel %vm39, %v644, 0.0
  %v659 = vrot.slane %v658, 4
  %v660 = vadd.f32 %v658, %v659
  %v661 = vrot.slane %v660, 2
  %v662 = vadd.f32 %v660, %v661
  %v663 = vrot.slane %v662, 1
  %v664 = vadd.f32 %v662, %v663
  %v665 = vsel %vm39, %v645, 0.0
  %v666 = vrot.slane %v665, 4
  %v667 = vadd.f32 %v665, %v666
  %v668 = vrot.slane %v667, 2
  %v669 = vadd.f32 %v667, %v668
  %v670 = vrot.slane %v669, 1
  %v671 = vadd.f32 %v669, %v670
  %v672 = vsel %vm39, %v646, 0.0
  %v673 = vrot.slane %v672, 4
  %v674 = vadd.f32 %v672, %v673
  %v675 = vrot.slane %v674, 2
  %v676 = vadd.f32 %v674, %v675
  %v677 = vrot.slane %v676, 1
  %v678 = vadd.f32 %v676, %v677
  %v679 = vsel %vm39, %v647, 0.0
  %v680 = vrot.slane %v679, 4
  %v681 = vadd.f32 %v679, %v680
  %v682 = vrot.slane %v681, 2
  %v683 = vadd.f32 %v681, %v682
  %v684 = vrot.slane %v683, 1
  %v685 = vadd.f32 %v683, %v684
  %v686 = vsel %vm39, %v648, 0.0
  %v687 = vrot.slane %v686, 4
  %v688 = vadd.f32 %v686, %v687
  %v689 = vrot.slane %v688, 2
  %v690 = vadd.f32 %v688, %v689
  %v691 = vrot.slane %v690, 1
  %v692 = vadd.f32 %v690, %v691
  %v693 = vsel %vm39, %v649, 0.0
  %v694 = vrot.slane %v693, 4
  %v695 = vadd.f32 %v693, %v694
  %v696 = vrot.slane %v695, 2
  %v697 = vadd.f32 %v695, %v696
  %v698 = vrot.slane %v697, 1
  %v699 = vadd.f32 %v697, %v698
  %v700 = vsel %vm39, %v650, 0.0
  %v701 = vrot.slane %v700, 4
  %v702 = vadd.f32 %v700, %v701
  %v703 = vrot.slane %v702, 2
  %v704 = vadd.f32 %v702, %v703
  %v705 = vrot.slane %v704, 1
  %v706 = vadd.f32 %v704, %v705
  %v715 = vsel %vm353, %v664, %v657
  %v716 = vsel %vm355, %v671, %v715
  %v717 = vsel %vm357, %v678, %v716
  %v718 = vsel %vm359, %v685, %v717
  %v719 = vsel %vm361, %v692, %v718
  %v720 = vsel %vm363, %v699, %v719
  %v721 = vsel %vm365, %v706, %v720
  %723 = vst.msk [vmem:[%s4] sm:$0xff] %vm39, %v721
  // Predicated region
  $region18: #{attention_layer_forward.1} parent=0 // pred_check
    _
  $region19: #{attention_layer_forward.1} parent=0 // pred_check_branch
    %725 = sbr.rel (0) target = $region21
  $region20: #{attention_layer_forward.1} parent=0 // pred_region
    _
  $region21: #{attention_layer_forward.1} parent=0 // pred_fallthru
    _
  // Predicated region
  $region22: #{attention_layer_forward.1} parent=0 // pred_check
    _
  $region23: #{attention_layer_forward.1} parent=0 // pred_check_branch
    %727 = sbr.rel (0) target = $region25
  $region24: #{attention_layer_forward.1} parent=0 // pred_region
    _
  $region25: #{attention_layer_forward.1} parent=0 // pred_fallthru
    _
  // Predicated region
  $region26: #{attention_layer_forward.1} parent=0 // pred_check
    _
  $region27: #{attention_layer_forward.1} parent=0 // pred_check_branch
    %729 = sbr.rel (0) target = $region29
  $region28: #{attention_layer_forward.1} parent=0 // pred_region
    _
  $region29: #{attention_layer_forward.1} parent=0 // pred_fallthru
    _
  // Predicated region
  $region30: #{attention_layer_forward.1} parent=0 // pred_check
    _
  $region31: #{attention_layer_forward.1} parent=0 // pred_check_branch
    %731 = sbr.rel (0) target = $region33
  $region32: #{attention_layer_forward.1} parent=0 // pred_region
    _
  $region33: #{attention_layer_forward.1} parent=0 // pred_fallthru
    _

</llo_original>
